<compile_context>
chip_gen: v6e
topology: v6e:2x2x1
jax: 0.10.0
libtpu: 0.0.40
codegen_flags: <defaults>
</compile_context>

<pallas_src>
import functools
import math

import jax
import jax.numpy as jnp
from jax.experimental import pallas as pl
from jax.experimental.pallas import tpu as pltpu

_TARGET_TILE_BYTES = 4 * 1024 * 1024   # ~4 MiB output tile (85-90% roofline regime)
_SPLIT_ROWS_THRESHOLD = 512            # enough work to amortize a 2nd grid step (v7x 2 TCs)


def _round_up(n: int, m: int) -> int:
    return -(-n // m) * m


def _pick_row_tile(rows: int, row_bytes: int) -> int:
    """Rows per grid step: ~4 MiB tiles, full-array block when it fits,
    and >=2 grid steps once there is enough work for both v7x TensorCores."""
    cap = max(8, (_TARGET_TILE_BYTES // row_bytes) // 8 * 8)
    if rows >= _SPLIT_ROWS_THRESHOLD:
        cap = min(cap, _round_up(_round_up(rows, 2) // 2, 8))
    if rows <= cap:
        return rows           # block == full array: always legal, no ragged tile
    return cap                # multiple of 8 (sublane constraint)


def _posemb_kernel(x_ref, tab_ref, o_ref, *, k: int):
    # x_ref:   (tr, k)    f32  k timesteps packed per output row (k == 1 when dim >= 128)
    # tab_ref: (k+1, W)   f32  rows 0..k-1: per-segment [freqs, freqs] (zero outside
    #                          lane segment j); row k: phase [0.., pi/2..] tiled to W.
    # o_ref:   (tr, W)         sin(z) = sin half, sin(z + pi/2) = cos half
    #                          -> one fused FMA chain + one sin + one full-width store.
    acc = x_ref[:, 0:1] * tab_ref[0:1, :] + tab_ref[k:k + 1, :]
    for j in range(1, k):                       # static unroll; k is tiny (1..32)
        acc = acc + x_ref[:, j:j + 1] * tab_ref[j:j + 1, :]
    o_ref[...] = jnp.sin(acc).astype(o_ref.dtype)


def diffusion_sinusoidal_pos_emb(x: jax.Array, dim: int,
                                 *, out_dtype=jnp.float32) -> jax.Array:
    """x: (B,) timesteps -> (B, dim) embedding (matches the PyTorch module)."""
    assert dim % 2 == 0, "dim must be even"
    assert dim >= 4, "dim must be >= 4 (half_dim - 1 appears in a denominator)"
    half_dim = dim // 2
    emb_scale = math.log(10000.0) / (half_dim - 1)

    # Hoisted constants (computed once, outside the kernel, bit-identical to ref).
    freqs = jnp.exp(jnp.arange(half_dim, dtype=jnp.float32) * (-emb_scale))
    freq_full = jnp.concatenate([freqs, freqs])                         # (dim,)
    phase = jnp.concatenate(
        [jnp.zeros((half_dim,), jnp.float32),
         jnp.full((half_dim,), jnp.pi / 2, dtype=jnp.float32)])         # (dim,)

    b = x.shape[0]
    xf = x.reshape(b).astype(jnp.float32)

    if dim < 128 and 128 % dim == 0:
        # Lane-dense packed layout: k timesteps per 128-lane output row.
        k = 128 // dim
        w = 128
        b_pad = _round_up(b, k)
        if b_pad != b:
            xf = jnp.pad(xf, (0, b_pad - b))
        rows = b_pad // k
        x2d = xf.reshape(rows, k)
        lane = jnp.arange(w)
        seg = (lane[None, :] // dim) == jnp.arange(k)[:, None]          # (k, w)
        freq_rows = jnp.where(seg, jnp.tile(freq_full, k)[None, :], 0.0)  # (k, w)
        phase_row = jnp.tile(phase, k)[None, :]                         # (1, w)
        tab = jnp.concatenate([freq_rows, phase_row], 0).astype(jnp.float32)
    else:
        k = 1
        w = dim
        rows = b
        x2d = xf.reshape(rows, 1)
        tab = jnp.stack([freq_full, phase]).astype(jnp.float32)          # (2, dim)

    out_itemsize = jnp.dtype(out_dtype).itemsize
    tb = _pick_row_tile(rows, w * out_itemsize)
    grid = (pl.cdiv(rows, tb),)

    out = pl.pallas_call(
        functools.partial(_posemb_kernel, k=k),
        out_shape=jax.ShapeDtypeStruct((rows, w), out_dtype),
        grid=grid,
        in_specs=[
            pl.BlockSpec((tb, k), lambda i: (i, 0)),       # per-tile timesteps
            pl.BlockSpec((k + 1, w), lambda i: (0, 0)),    # broadcast freq/phase table
        ],
        out_specs=pl.BlockSpec((tb, w), lambda i: (i, 0)),
        compiler_params=pltpu.CompilerParams(
            dimension_semantics=("parallel",),
        ),
        cost_estimate=pl.CostEstimate(
            flops=2 * k * rows * w,
            transcendentals=rows * w,
            bytes_accessed=4 * (rows * k + (k + 1) * w) + rows * w * out_itemsize,
        ),
    )(x2d, tab)

    if k > 1:
        out = out.reshape(b_pad, dim)[:b]                  # row-major: pure view
    return out


def _reference(x: jax.Array, dim: int) -> jax.Array:
    half_dim = dim // 2
    emb = math.log(10000.0) / (half_dim - 1)
    emb = jnp.exp(jnp.arange(half_dim, dtype=jnp.float32) * -emb)
    emb = x[:, None] * emb[None, :]
    return jnp.concatenate([jnp.sin(emb), jnp.cos(emb)], axis=-1)


if __name__ == "__main__":
    key = jax.random.PRNGKey(0)
    cases = [
        (8, 64),     # dim < 128 -> lane-dense packed path (k = 2)
        (5, 256),    # small ragged batch -> full-array block, single grid step
        (600, 128),  # rows >= 512 -> 2 grid steps (v7x dual-TC), ragged last tile
    ]
    for i, (B, DIM) in enumerate(cases):
        kb = jax.random.fold_in(key, i)
        # Moderate positive diffusion timesteps keep the f32 sin/cos argument
        # reduction (and the sin(z+pi/2) cos trick) well within tolerance.
        x = jax.random.uniform(kb, (B,), dtype=jnp.float32, minval=0.0, maxval=100.0)

        out = diffusion_sinusoidal_pos_emb(x, DIM)
        out = jax.block_until_ready(out)

        ref = _reference(x, DIM)
        assert out.shape == (B, DIM), (out.shape, (B, DIM))
        assert jnp.allclose(out, ref, atol=1e-4, rtol=1e-4), \
            f"mismatch vs reference for B={B}, dim={DIM}"

    print("KERNEL_OK")
</pallas_src>

<mosaic_0001>
module attributes {stable_mosaic.version = 11 : i64} {
  func.func @_posemb_kernel(%arg0: i32, %arg1: memref<4x2xf32, #tpu.memory_space<vmem>>, %arg2: memref<3x128xf32, #tpu.memory_space<vmem>>, %arg3: memref<4x128xf32, #tpu.memory_space<vmem>>) attributes {dimension_semantics = [#tpu.dimension_semantics<parallel>], iteration_bounds = array<i64: 1>, scalar_prefetch = 0 : i64, scratch_operands = 0 : i64, tpu.core_type = #tpu.core_type<tc>, window_params = [{transform_indices = @transform_0, window_bounds = array<i64: 4, 2>}, {pipeline_mode = #tpu.pipeline_mode<synchronous>, transform_indices = @transform_1, window_bounds = array<i64: 3, 128>}, {transform_indices = @transform_2, window_bounds = array<i64: 4, 128>}]} {
    %c0 = arith.constant 0 : index
    %c0_0 = arith.constant 0 : index
    %0 = vector.load %arg1[%c0, %c0_0] : memref<4x2xf32, #tpu.memory_space<vmem>>, vector<4x1xf32>
    %c0_1 = arith.constant 0 : index
    %c0_2 = arith.constant 0 : index
    %1 = vector.load %arg2[%c0_1, %c0_2] : memref<3x128xf32, #tpu.memory_space<vmem>>, vector<1x128xf32>
    %2 = vector.broadcast %0 : vector<4x1xf32> to vector<4x128xf32>
    %3 = vector.broadcast %1 : vector<1x128xf32> to vector<4x128xf32>
    %4 = arith.mulf %2, %3 : vector<4x128xf32>
    %c2 = arith.constant 2 : index
    %c0_3 = arith.constant 0 : index
    %5 = vector.load %arg2[%c2, %c0_3] : memref<3x128xf32, #tpu.memory_space<vmem>>, vector<1x128xf32>
    %6 = vector.broadcast %5 : vector<1x128xf32> to vector<4x128xf32>
    %7 = arith.addf %4, %6 : vector<4x128xf32>
    %c0_4 = arith.constant 0 : index
    %c1 = arith.constant 1 : index
    %8 = vector.load %arg1[%c0_4, %c1] : memref<4x2xf32, #tpu.memory_space<vmem>>, vector<4x1xf32>
    %c1_5 = arith.constant 1 : index
    %c0_6 = arith.constant 0 : index
    %9 = vector.load %arg2[%c1_5, %c0_6] : memref<3x128xf32, #tpu.memory_space<vmem>>, vector<1x128xf32>
    %10 = vector.broadcast %8 : vector<4x1xf32> to vector<4x128xf32>
    %11 = vector.broadcast %9 : vector<1x128xf32> to vector<4x128xf32>
    %12 = arith.mulf %10, %11 : vector<4x128xf32>
    %13 = arith.addf %7, %12 : vector<4x128xf32>
    %14 = math.sin %13 : vector<4x128xf32>
    %c0_7 = arith.constant 0 : index
    %c0_8 = arith.constant 0 : index
    %15 = vector.load %arg3[%c0_7, %c0_8] : memref<4x128xf32, #tpu.memory_space<vmem>>, vector<4x128xf32>
    tpu.vector_store %arg3[%c0_7, %c0_8], %14 {strides = array<i32>} : memref<4x128xf32, #tpu.memory_space<vmem>>, vector<4x128xf32>,
    return
  }
  func.func @transform_0(%arg0: i32) -> (i32, i32) {
    %c0_i32 = arith.constant 0 : i32
    %c0_i32_0 = arith.constant 0 : i32
    return %arg0, %c0_i32 : i32, i32
  }
  func.func @transform_1(%arg0: i32) -> (i32, i32) {
    %c0_i32 = arith.constant 0 : i32
    %c0_i32_0 = arith.constant 0 : i32
    %c0_i32_1 = arith.constant 0 : i32
    return %c0_i32, %c0_i32_0 : i32, i32
  }
  func.func @transform_2(%arg0: i32) -> (i32, i32) {
    %c0_i32 = arith.constant 0 : i32
    %c0_i32_0 = arith.constant 0 : i32
    return %arg0, %c0_i32 : i32, i32
  }
}

</mosaic_0001>

<llo_original>
// kernel: tpu_custom_call.1
$region0: #{tpu_custom_call.1}
  #allocation0 [shape = 'u32[]', space=smem, size = 0x4, offset = 0x4, fixed_abs, tag = 'smem constant byte address 0x4 - core index']
  #allocation1 [shape = 'u32[144,128]{1,0:T(1,128)}', space=vmem, size = 0x12000, scoped, tag = 'internal scratch']
  %s0 = inlined_call_operand.vmem [shape: f32[4,2], index: 0, kind: input, shape index: {}]
  %s1 = inlined_call_operand.vmem [shape: f32[3,128], index: 1, kind: input, shape index: {}]
  %s2 = inlined_call_operand.hbm [shape: f32[4,128], index: 2, kind: output, shape index: {}]
  %s3 = sld [smem:[#allocation0]]
  $region18: #{tpu_custom_call.1} parent=0
    _
  %s5 = ssub.s32 1, %s3
  %s6 = scalar_select 0, %s5, %s3
  $region1: #{tpu_custom_call.1} parent=0
    #allocation2 [shape = 'u8[2048]{0}', space=vmem, size = 0x800, scoped, tag = 'output window, operand 0, single buffered']
    #allocation3 [shape = 's32[1]{0}', space=sflag, size = 0x4, scoped, tag = 'scoped memory for tpu_custom_call.1']
    %7 = vsyncpa [#allocation3], 0
    // Predicated region
    $region2: #{tpu_custom_call.1} parent=1 // pred_check
      _
    $region3: #{tpu_custom_call.1} parent=1 // pred_check_branch
      %9 = sbr.rel (0) target = $region5
    $region4: #{tpu_custom_call.1} parent=1 // pred_region
      _
    $region5: #{tpu_custom_call.1} parent=1 // pred_fallthru
      _
    // Predicated region
    $region6: #{tpu_custom_call.1} parent=1 // pred_check
      _
    $region7: #{tpu_custom_call.1} parent=1 // pred_check_branch
      %11 = sbr.rel (0) target = $region9
    $region8: #{tpu_custom_call.1} parent=1 // pred_region
      _
    $region9: #{tpu_custom_call.1} parent=1 // pred_fallthru
      _
    %v12 = vld [vmem:[%s0] sm:$0xf]
    %v13 = vld [vmem:[%s1] sm:$0x1]
    %15 = vset.pattern.permute.xlu0 0
    %16 = vperm.xlu0 %15, %v12
    %v17 = vpop.permute.xlu0 %16
    %v19 = vlaneseq
    %v20 = vshrl.u32 %v19, 7
    %v21 = vsub.s32 0, %v20
    %v22 = vrot.slane %v13, %v21
    %v23 = vmul.f32 %v17, %v22
    %v24 = vld [vmem:[%s1 + $0x2] sm:$0x1]
    %v25 = vlaneseq
    %v26 = vshrl.u32 %v25, 7
    %v27 = vsub.s32 0, %v26
    %v28 = vrot.slane %v24, %v27
    %v29 = vadd.f32 %v23, %v28
    %v30 = vld [vmem:[%s1 + $0x1] sm:$0x1]
    %31 = vset.pattern.permute.xlu0 1
    %32 = vperm.xlu0 %31, %v12
    %v33 = vpop.permute.xlu0 %32
    %v35 = vlaneseq
    %v36 = vshrl.u32 %v35, 7
    %v37 = vsub.s32 0, %v36
    %v38 = vrot.slane %v30, %v37
    %v39 = vmul.f32 %v33, %v38
    %v40 = vadd.f32 %v29, %v39
    %v41 = vand.u32 2147483647, %v40
    %vm42 = vcmp.le.f32.partialorder %v41, 0.7853982
    %vm43 = vcmp.lt.s32.totalorder %v40, 0
    %v44 = vand.u32 %v40, 2139095040
    %v45 = vshrl.u32 %v44, 23
    %v46 = vsub.s32 %v45, 127
    %v47 = vand.u32 2147483647, %v40
    %v48 = vand.u32 %v47, 8388607
    %v49 = vor.u32 %v48, 8388608
    %v50 = vsub.s32 0, %v49
    %v51 = vadd.s32 %v46, 1
    %vm52 = vcmp.gt.s32.totalorder %v51, 0
    %v53 = vsel %vm52, %v51, 0
    %v54 = vshrl.u32 %v53, 5
    %v55 = vand.u32 %v53, 31
    %v56 = vsub.s32 32, %v55
    %v57 = vshrl.u32 683565275, %v56
    %v58 = vshll.u32 683565275, %v55
    %v59 = vshrl.u32 2475754826, %v56
    %v60 = vor.u32 %v58, %v59
    %v61 = vshll.u32 2475754826, %v55
    %v62 = vshrl.u32 2131351028, %v56
    %v63 = vor.u32 %v61, %v62
    %v64 = vshll.u32 2131351028, %v55
    %v65 = vshrl.u32 2102212464, %v56
    %v66 = vor.u32 %v64, %v65
    %v67 = vshll.u32 2102212464, %v55
    %v68 = vshrl.u32 920167782, %v56
    %v69 = vor.u32 %v67, %v68
    %v70 = vshll.u32 920167782, %v55
    %v71 = vshrl.u32 1326507024, %v56
    %v72 = vor.u32 %v70, %v71
    %vm73 = vcmp.lt.s32.totalorder %v54, 1
    %vm74 = vcmp.lt.s32.totalorder %v54, 2
    %vm75 = vcmp.lt.s32.totalorder %v54, 3
    %vm76 = vcmp.lt.s32.totalorder %v54, 4
    %v77 = vsel %vm73, %v57, %v60
    %v78 = vsel %vm76, %v66, 2102212464
    %v79 = vsel %vm75, %v63, %v78
    %v80 = vsel %vm74, %v77, %v79
    %v81 = vsel %vm73, %v60, %v63
    %v82 = vsel %vm76, %v69, 920167782
    %v83 = vsel %vm75, %v66, %v82
    %v84 = vsel %vm74, %v81, %v83
    %v85 = vsel %vm73, %v63, %v66
    %v86 = vsel %vm76, %v72, 1326507024
    %v87 = vsel %vm75, %v69, %v86
    %v88 = vsel %vm74, %v85, %v87
    %v89 = vshll.u32 %v49, 8
    %v90 = vmul.u32.u64.compose %v89, %v88
    %v91 = vextract.low.u32 %v90
    %v92 = vextract.high.u32 %v90
    %v93 = vmul.u32.u64.compose %v89, %v84
    %v94 = vextract.low.u32 %v93
    %v95 = vextract.high.u32 %v93
    %v96 = vmul.u32 %v89, %v80
    %v97 = vadd.s32 %v92, %v94
    %vm98 = vc.u32 %v92, %v94
    %v99 = vadd.s32 %v95, 1
    %v100 = vsel %vm98, %v99, %v95
    %v101 = vadd.s32 %v96, %v100
    %v102 = vadd.s32 %v101, 536870912
    %v103 = vshrl.u32 %v102, 30
    %v104 = vshll.u32 %v103, 30
    %v105 = vsub.s32 %v101, %v104
    %vm106 = vcmp.lt.s32.totalorder %v105, 0
    %v107 = vsub.s32 0, %v105
    %v108 = vsel %vm106, %v107, %v105
    %v109 = vclz %v108
    %v110 = vsub.s32 %v109, 2
    %vm111 = vcmp.gt.s32.totalorder 0, %v110
    %v112 = vsel %vm111, 0, %v110
    %v113 = vsub.s32 32, %v112
    %v114 = vshll.u32 %v105, %v112
    %v115 = vshrl.u32 %v97, %v113
    %v116 = vor.u32 %v114, %v115
    %v117 = vsub.s32 4294967266, %v112
    %v118 = vadd.s32 %v117, 127
    %v119 = vshll.u32 %v118, 23
    %v120 = vor.u32 4788187, %v119
    %v121 = vand.u32 2147483647, %v120
    %v123 = vcvt.s32.f32 %v116
    %v124 = vmul.f32 %v123, %v121
    %v125 = vxor.u32 %v124, 2147483648
    %v126 = vsel %vm43, %v125, %v124
    %v127 = vsub.s32 4, %v103
    %v128 = vsel %vm43, %v127, %v103
    %v129 = vsel %vm42, %v40, %v126
    %v130 = vsel %vm42, 0, %v128
    %v131 = vcosq.f32.pop %v129
    %v132 = vsinq.f32.pop %v129
    %vm133 = vweird.f32 %v40
    %v134 = vadd.s32 %v130, 3
    %v135 = vand.u32 %v134, 3
    %vm136 = vcmp.lt.s32.totalorder %v135, 2
    %vm137 = vcmp.eq.s32.totalorder %v135, 0
    %v138 = vxor.u32 %v132, 2147483648
    %v139 = vsel %vm137, %v131, %v138
    %vm140 = vcmp.eq.s32.totalorder %v135, 2
    %v141 = vxor.u32 %v131, 2147483648
    %v142 = vsel %vm140, %v141, %v132
    %v143 = vsel %vm136, %v139, %v142
    %v144 = vsel %vm133, nan, %v143
    %145 = vst [vmem:[#allocation2] sm:$0xf] %v144
    // Predicated region
    $region10: #{tpu_custom_call.1} parent=1 // pred_check
      _
    $region11: #{tpu_custom_call.1} parent=1 // pred_check_branch
      %147 = sbr.rel (0) target = $region13
    $region12: #{tpu_custom_call.1} parent=1 // pred_region
      %s149 = ssub.s32 64, 64
      %150 = vsyncadd [#allocation3], %s149
      %s152 = sshll.u32 [#allocation2], 4
      %s153 = int_to_ptr.vmem [resolvable:$true] %s152
      %155 = dma.vmem_to_hbm [thread:$0]  %s153, 64, %s2, [#allocation3]
    $region13: #{tpu_custom_call.1} parent=1 // pred_fallthru
      _
    // Predicated region
    $region14: #{tpu_custom_call.1} parent=1 // pred_check
      _
    $region15: #{tpu_custom_call.1} parent=1 // pred_check_branch
      %157 = sbr.rel (0) target = $region17
    $region16: #{tpu_custom_call.1} parent=1 // pred_region
      %158 = dma.done [#allocation3], 64
    $region17: #{tpu_custom_call.1} parent=1 // pred_fallthru
      _
    %159 = vsyncpa [#allocation3], 1

</llo_original>
